<compile_context>
chip_gen: v6e
topology: v6e:2x2x1
jax: 0.10.0
libtpu: 0.0.40
codegen_flags: <defaults>
</compile_context>

<pallas_src>
import functools
from typing import Dict, List, Sequence

import jax
import jax.numpy as jnp
import numpy as np
from jax.experimental import pallas as pl
from jax.experimental.pallas import tpu as pltpu

_SUBLANE = 8
_TILE_ROWS_TARGET = 4096  # packed rows per grid step


def _round_up(x: int, m: int) -> int:
    return (x + m - 1) // m * m


def _mxu_lane_target() -> int:
    """256-wide packing on v6e/v7x (2x256^2 MXU), 128 elsewhere."""
    try:
        kind = jax.devices()[0].device_kind.lower()
    except Exception:
        return 128
    if "v6" in kind or "v7" in kind:
        return 256
    return 128


def _choose_fold(layers: Sequence[int]) -> int:
    max_w = max(layers)
    fold = max(1, _mxu_lane_target() // max_w)
    return min(fold, 16)


def _choose_tile_rows(n_rows: int) -> int:
    if n_rows >= 2 * _TILE_ROWS_TARGET:
        return _TILE_ROWS_TARGET
    # Small/medium batches: aim for >=2 grid tiles so ("parallel",) can split
    # the grid across v7x's two TensorCores.
    return max(_SUBLANE, _round_up(max(1, (n_rows + 1) // 2), _SUBLANE))


def _weight_norm(w: jnp.ndarray) -> jnp.ndarray:
    """V = W / ||W||_col; zero-norm columns map to 0 (torch would give inf/NaN)."""
    norm_sq = jnp.sum(w * w, axis=0, keepdims=True)
    inv = jnp.where(norm_sq > 0.0, jax.lax.rsqrt(norm_sq), 0.0)
    return w * inv


def _block_diag(v: jnp.ndarray, fold: int) -> jnp.ndarray:
    """fold copies of v on the diagonal: (d_in, d_out) -> (fold*d_in, fold*d_out)."""
    if fold == 1:
        return v
    di, do = v.shape
    out = jnp.zeros((fold * di, fold * do), v.dtype)
    for f in range(fold):
        out = out.at[f * di:(f + 1) * di, f * do:(f + 1) * do].set(v)
    return out


# ---------------------------------------------------------------------------
# Fused kernel: normalize input + all layers; H never leaves VMEM/vregs.
# ---------------------------------------------------------------------------
def _fused_mlp_kernel(h_ref, mean_ref, istd_ref, *rest, num_weights: int):
    params = rest[:3 * num_weights]        # (V_bd_bf16, g, b) per layer
    o_ref = rest[3 * num_weights]

    # Input normalization (f32, VPU only: subtract + multiply).
    h = (h_ref[...] - mean_ref[...]) * istd_ref[...]

    for i in range(num_weights):
        v_ref = params[3 * i]              # bf16 block-diagonal normalized weight
        g_ref = params[3 * i + 1]          # f32
        b_ref = params[3 * i + 2]          # f32
        # bf16 operands, f32 accumulation on the MXU.
        h = jnp.dot(h.astype(jnp.bfloat16), v_ref[...],
                    preferred_element_type=jnp.float32)
        h = g_ref[...] * h + b_ref[...]
        if i < num_weights - 1:
            h = h * jax.nn.sigmoid(h)      # SiLU; exp lands on the EUP slot

    o_ref[...] = h.astype(o_ref.dtype)


@functools.partial(jax.jit, static_argnames=("fold", "tile_rows"))
def _fused_forward(h_packed, mean_t, istd_t, weights, biases, gammas, *,
                   fold, tile_rows):
    n_rows, din_p = h_packed.shape
    num_weights = len(weights)
    num_tiles = n_rows // tile_rows

    # Hoisted per-call (not per-tile): weight normalization, block-diagonal
    # packing, bf16 cast, and fold-tiling of gamma/bias.
    v_bd, g_t, b_t = [], [], []
    for w, g, b in zip(weights, gammas, biases):
        v = _weight_norm(w)
        v_bd.append(_block_diag(v, fold).astype(jnp.bfloat16))
        g_t.append(jnp.tile(g, (1, fold)))
        b_t.append(jnp.tile(b, (1, fold)))
    dout_p = v_bd[-1].shape[1]

    in_specs = [
        pl.BlockSpec((tile_rows, din_p), lambda i: (i, 0)),   # H: moves with grid
        pl.BlockSpec((1, din_p), lambda i: (0, 0)),           # mean: resident
        pl.BlockSpec((1, din_p), lambda i: (0, 0)),           # inv_std: resident
    ]
    inputs = [h_packed, mean_t, istd_t]
    for v, g, b in zip(v_bd, g_t, b_t):
        in_specs.append(pl.BlockSpec(v.shape, lambda i: (0, 0)))
        in_specs.append(pl.BlockSpec(g.shape, lambda i: (0, 0)))
        in_specs.append(pl.BlockSpec(b.shape, lambda i: (0, 0)))
        inputs += [v, g, b]

    kernel = functools.partial(_fused_mlp_kernel, num_weights=num_weights)
    return pl.pallas_call(
        kernel,
        out_shape=jax.ShapeDtypeStruct((n_rows, dout_p), jnp.float32),
        grid_spec=pltpu.PrefetchScalarGridSpec(
            num_scalar_prefetch=0,
            grid=(num_tiles,),
            in_specs=in_specs,
            out_specs=pl.BlockSpec((tile_rows, dout_p), lambda i: (i, 0)),
        ),
        compiler_params=pltpu.CompilerParams(
            dimension_semantics=("parallel",),      # shards N tiles across v7x's 2 TCs
            vmem_limit_bytes=32 * 1024 * 1024,      # actual usage ~10-15 MiB
        ),
    )(*inputs)


# ---------------------------------------------------------------------------
# Module wrapper
# ---------------------------------------------------------------------------
class NetHFMPallas:
    """JAX/Pallas port of NetHFM (single fused TPU kernel for the forward)."""

    def __init__(self, mean, std, layers: List[int], output_names: List[str], key):
        self.num_layers = len(layers)
        self.layers = list(layers)
        self.output_names = list(output_names)

        d0 = layers[0]
        self.X_mean = jnp.asarray(mean, dtype=jnp.float32).reshape(1, d0)
        self.X_std = jnp.asarray(std, dtype=jnp.float32).reshape(1, d0)

        # Raw (torch-equivalent) parameters.
        self.weights, self.biases, self.gammas = [], [], []
        for i in range(self.num_layers - 1):
            key, sub = jax.random.split(key)
            w = jax.random.normal(sub, (layers[i], layers[i + 1]), dtype=jnp.float32)
            self.weights.append(w)
            self.biases.append(jnp.zeros((1, layers[i + 1]), dtype=jnp.float32))
            self.gammas.append(jnp.ones((1, layers[i + 1]), dtype=jnp.float32))

        # Lane-packing fold (block-diagonal packing of `fold` batch rows).
        self.fold = _choose_fold(self.layers)
        inv_std = 1.0 / self.X_std
        self._mean_t = jnp.tile(self.X_mean, (1, self.fold))
        self._istd_t = jnp.tile(inv_std, (1, self.fold))

    def __call__(self, spatial: Sequence[jnp.ndarray], time: jnp.ndarray
                 ) -> Dict[str, jnp.ndarray]:
        h = jnp.concatenate(list(spatial) + [time], axis=1).astype(jnp.float32)
        n, d_in = h.shape
        assert d_in == self.layers[0], "input feature dim mismatch"

        fold = self.fold
        n_rows = -(-n // fold)                       # packed rows
        tile_rows = _choose_tile_rows(n_rows)
        n_rows_pad = _round_up(n_rows, tile_rows)
        n_total = n_rows_pad * fold

        # Pack `fold` consecutive batch rows into the lane dimension
        # (contiguous row-major reshape; padded rows are zeros and discarded).
        h_full = jnp.zeros((n_total, d_in), jnp.float32).at[:n].set(h)
        h_packed = h_full.reshape(n_rows_pad, fold * d_in)

        out_packed = _fused_forward(
            h_packed, self._mean_t, self._istd_t,
            tuple(self.weights), tuple(self.biases), tuple(self.gammas),
            fold=fold, tile_rows=tile_rows,
        )

        d_out = self.layers[-1]
        out = out_packed.reshape(n_total, d_out)[:n]     # unpack + drop padding
        return {name: out[:, i:i + 1] for i, name in enumerate(self.output_names)}


# ---------------------------------------------------------------------------
# Pure-JAX references for correctness checks.
#   use_bf16=True mirrors the kernel's bf16-operand matmuls (tight check);
#   use_bf16=False mirrors the torch f32 forward (loose check).
# ---------------------------------------------------------------------------
def _reference_forward(h, mean, std, weights, biases, gammas, use_bf16: bool):
    if use_bf16:
        h = (h - mean) * (1.0 / std)
    else:
        h = (h - mean) / std
    n_w = len(weights)
    for i, (w, b, g) in enumerate(zip(weights, biases, gammas)):
        if use_bf16:
            v = _weight_norm(w).astype(jnp.bfloat16)
            h = jnp.dot(h.astype(jnp.bfloat16), v,
                        preferred_element_type=jnp.float32)
        else:
            v = w / jnp.linalg.norm(w, axis=0, keepdims=True)
            h = h @ v
        h = g * h + b
        if i < n_w - 1:
            h = h * jax.nn.sigmoid(h)
    return h


# ---------------------------------------------------------------------------
# Example run
# ---------------------------------------------------------------------------
if __name__ == "__main__":
    key = jax.random.PRNGKey(0)

    N = 64                       # batch (collocation points)
    layers = [3, 32, 32, 4]      # input dim 3 = (x, y, t); 4 outputs
    output_names = ["u", "v", "w", "p"]

    mean = np.array([[0.5, -0.25, 1.0]], dtype=np.float32)
    std = np.array([[1.5, 2.0, 0.75]], dtype=np.float32)

    key, k_net, kx, ky, kt = jax.random.split(key, 5)
    net = NetHFMPallas(mean, std, layers, output_names, k_net)

    x = jax.random.normal(kx, (N, 1), dtype=jnp.float32)
    y = jax.random.normal(ky, (N, 1), dtype=jnp.float32)
    t = jax.random.uniform(kt, (N, 1), dtype=jnp.float32)

    outputs = net([x, y], t)
    for name in output_names:
        jax.block_until_ready(outputs[name])
        assert outputs[name].shape == (N, 1)

    h0 = jnp.concatenate([x, y, t], axis=1)
    out_kernel = jnp.concatenate([outputs[name] for name in output_names], axis=1)

    # Tight check vs a reference using identical bf16 MXU operands.
    ref_bf16 = _reference_forward(h0, net.X_mean, net.X_std,
                                  net.weights, net.biases, net.gammas,
                                  use_bf16=True)
    np.testing.assert_allclose(np.asarray(out_kernel), np.asarray(ref_bf16),
                               rtol=1e-3, atol=1e-3)

    # Loose check vs the full-f32 torch-semantics reference (bf16 operands
    # introduce ~0.5-1% relative error through 3 layers).
    ref_f32 = _reference_forward(h0, net.X_mean, net.X_std,
                                 net.weights, net.biases, net.gammas,
                                 use_bf16=False)
    np.testing.assert_allclose(np.asarray(out_kernel), np.asarray(ref_f32),
                               rtol=5e-2, atol=1e-1)

    print("KERNEL_OK")
</pallas_src>

<mosaic_0001>
module attributes {stable_mosaic.version = 11 : i64} {
  func.func @_fused_mlp_kernel(%arg0: i32, %arg1: memref<8x12xf32, #tpu.memory_space<vmem>>, %arg2: memref<1x12xf32, #tpu.memory_space<vmem>>, %arg3: memref<1x12xf32, #tpu.memory_space<vmem>>, %arg4: memref<12x128xbf16, #tpu.memory_space<vmem>>, %arg5: memref<1x128xf32, #tpu.memory_space<vmem>>, %arg6: memref<1x128xf32, #tpu.memory_space<vmem>>, %arg7: memref<128x128xbf16, #tpu.memory_space<vmem>>, %arg8: memref<1x128xf32, #tpu.memory_space<vmem>>, %arg9: memref<1x128xf32, #tpu.memory_space<vmem>>, %arg10: memref<128x16xbf16, #tpu.memory_space<vmem>>, %arg11: memref<1x16xf32, #tpu.memory_space<vmem>>, %arg12: memref<1x16xf32, #tpu.memory_space<vmem>>, %arg13: memref<8x16xf32, #tpu.memory_space<vmem>>) attributes {dimension_semantics = [#tpu.dimension_semantics<parallel>], iteration_bounds = array<i64: 2>, scalar_prefetch = 0 : i64, scratch_operands = 0 : i64, tpu.core_type = #tpu.core_type<tc>, window_params = [{transform_indices = @transform_0, window_bounds = array<i64: 8, 12>}, {pipeline_mode = #tpu.pipeline_mode<synchronous>, transform_indices = @transform_1, window_bounds = array<i64: 1, 12>}, {pipeline_mode = #tpu.pipeline_mode<synchronous>, transform_indices = @transform_2, window_bounds = array<i64: 1, 12>}, {pipeline_mode = #tpu.pipeline_mode<synchronous>, transform_indices = @transform_3, window_bounds = array<i64: 12, 128>}, {pipeline_mode = #tpu.pipeline_mode<synchronous>, transform_indices = @transform_4, window_bounds = array<i64: 1, 128>}, {pipeline_mode = #tpu.pipeline_mode<synchronous>, transform_indices = @transform_5, window_bounds = array<i64: 1, 128>}, {pipeline_mode = #tpu.pipeline_mode<synchronous>, transform_indices = @transform_6, window_bounds = array<i64: 128, 128>}, {pipeline_mode = #tpu.pipeline_mode<synchronous>, transform_indices = @transform_7, window_bounds = array<i64: 1, 128>}, {pipeline_mode = #tpu.pipeline_mode<synchronous>, transform_indices = @transform_8, window_bounds = array<i64: 1, 128>}, {pipeline_mode = #tpu.pipeline_mode<synchronous>, transform_indices = @transform_9, window_bounds = array<i64: 128, 16>}, {pipeline_mode = #tpu.pipeline_mode<synchronous>, transform_indices = @transform_10, window_bounds = array<i64: 1, 16>}, {pipeline_mode = #tpu.pipeline_mode<synchronous>, transform_indices = @transform_11, window_bounds = array<i64: 1, 16>}, {transform_indices = @transform_12, window_bounds = array<i64: 8, 16>}]} {
    %c0 = arith.constant 0 : index
    %c0_0 = arith.constant 0 : index
    %0 = vector.load %arg1[%c0, %c0_0] : memref<8x12xf32, #tpu.memory_space<vmem>>, vector<8x12xf32>
    %c0_1 = arith.constant 0 : index
    %c0_2 = arith.constant 0 : index
    %1 = vector.load %arg2[%c0_1, %c0_2] : memref<1x12xf32, #tpu.memory_space<vmem>>, vector<1x12xf32>
    %2 = vector.broadcast %1 : vector<1x12xf32> to vector<8x12xf32>
    %3 = arith.subf %0, %2 : vector<8x12xf32>
    %c0_3 = arith.constant 0 : index
    %c0_4 = arith.constant 0 : index
    %4 = vector.load %arg3[%c0_3, %c0_4] : memref<1x12xf32, #tpu.memory_space<vmem>>, vector<1x12xf32>
    %5 = vector.broadcast %4 : vector<1x12xf32> to vector<8x12xf32>
    %6 = arith.mulf %3, %5 : vector<8x12xf32>
    %7 = arith.truncf %6 : vector<8x12xf32> to vector<8x12xbf16>
    %c0_5 = arith.constant 0 : index
    %c0_6 = arith.constant 0 : index
    %8 = vector.load %arg4[%c0_5, %c0_6] : memref<12x128xbf16, #tpu.memory_space<vmem>>, vector<12x128xbf16>
    %cst = arith.constant dense<0.000000e+00> : vector<8x128xf32>
    %9 = tpu.matmul %7, %8, %cst {dimension_numbers = #tpu.dot_dimension_numbers<[1], [0], [0], [1], [0, 0, 1, 1], [], []>} : vector<8x12xbf16>, vector<12x128xbf16>, vector<8x128xf32> -> vector<8x128xf32>
    %c0_7 = arith.constant 0 : index
    %c0_8 = arith.constant 0 : index
    %10 = vector.load %arg5[%c0_7, %c0_8] : memref<1x128xf32, #tpu.memory_space<vmem>>, vector<1x128xf32>
    %11 = vector.broadcast %10 : vector<1x128xf32> to vector<8x128xf32>
    %12 = arith.mulf %11, %9 : vector<8x128xf32>
    %c0_9 = arith.constant 0 : index
    %c0_10 = arith.constant 0 : index
    %13 = vector.load %arg6[%c0_9, %c0_10] : memref<1x128xf32, #tpu.memory_space<vmem>>, vector<1x128xf32>
    %14 = vector.broadcast %13 : vector<1x128xf32> to vector<8x128xf32>
    %15 = arith.addf %12, %14 : vector<8x128xf32>
    %16 = arith.negf %15 : vector<8x128xf32>
    %17 = math.exp %16 : vector<8x128xf32>
    %cst_11 = arith.constant 1.000000e+00 : f32
    %18 = vector.broadcast %cst_11 : f32 to vector<8x128xf32>
    %19 = arith.addf %18, %17 : vector<8x128xf32>
    %20 = arith.divf %18, %19 : vector<8x128xf32>
    %21 = arith.mulf %15, %20 : vector<8x128xf32>
    %22 = arith.truncf %21 : vector<8x128xf32> to vector<8x128xbf16>
    %c0_12 = arith.constant 0 : index
    %c0_13 = arith.constant 0 : index
    %23 = vector.load %arg7[%c0_12, %c0_13] : memref<128x128xbf16, #tpu.memory_space<vmem>>, vector<128x128xbf16>
    %cst_14 = arith.constant dense<0.000000e+00> : vector<8x128xf32>
    %24 = tpu.matmul %22, %23, %cst_14 {dimension_numbers = #tpu.dot_dimension_numbers<[1], [0], [0], [1], [0, 0, 1, 1], [], []>} : vector<8x128xbf16>, vector<128x128xbf16>, vector<8x128xf32> -> vector<8x128xf32>
    %c0_15 = arith.constant 0 : index
    %c0_16 = arith.constant 0 : index
    %25 = vector.load %arg8[%c0_15, %c0_16] : memref<1x128xf32, #tpu.memory_space<vmem>>, vector<1x128xf32>
    %26 = vector.broadcast %25 : vector<1x128xf32> to vector<8x128xf32>
    %27 = arith.mulf %26, %24 : vector<8x128xf32>
    %c0_17 = arith.constant 0 : index
    %c0_18 = arith.constant 0 : index
    %28 = vector.load %arg9[%c0_17, %c0_18] : memref<1x128xf32, #tpu.memory_space<vmem>>, vector<1x128xf32>
    %29 = vector.broadcast %28 : vector<1x128xf32> to vector<8x128xf32>
    %30 = arith.addf %27, %29 : vector<8x128xf32>
    %31 = arith.negf %30 : vector<8x128xf32>
    %32 = math.exp %31 : vector<8x128xf32>
    %cst_19 = arith.constant 1.000000e+00 : f32
    %33 = vector.broadcast %cst_19 : f32 to vector<8x128xf32>
    %34 = arith.addf %33, %32 : vector<8x128xf32>
    %35 = arith.divf %33, %34 : vector<8x128xf32>
    %36 = arith.mulf %30, %35 : vector<8x128xf32>
    %37 = arith.truncf %36 : vector<8x128xf32> to vector<8x128xbf16>
    %c0_20 = arith.constant 0 : index
    %c0_21 = arith.constant 0 : index
    %38 = vector.load %arg10[%c0_20, %c0_21] : memref<128x16xbf16, #tpu.memory_space<vmem>>, vector<128x16xbf16>
    %cst_22 = arith.constant dense<0.000000e+00> : vector<8x16xf32>
    %39 = tpu.matmul %37, %38, %cst_22 {dimension_numbers = #tpu.dot_dimension_numbers<[1], [0], [0], [1], [0, 0, 1, 1], [], []>} : vector<8x128xbf16>, vector<128x16xbf16>, vector<8x16xf32> -> vector<8x16xf32>
    %c0_23 = arith.constant 0 : index
    %c0_24 = arith.constant 0 : index
    %40 = vector.load %arg11[%c0_23, %c0_24] : memref<1x16xf32, #tpu.memory_space<vmem>>, vector<1x16xf32>
    %41 = vector.broadcast %40 : vector<1x16xf32> to vector<8x16xf32>
    %42 = arith.mulf %41, %39 : vector<8x16xf32>
    %c0_25 = arith.constant 0 : index
    %c0_26 = arith.constant 0 : index
    %43 = vector.load %arg12[%c0_25, %c0_26] : memref<1x16xf32, #tpu.memory_space<vmem>>, vector<1x16xf32>
    %44 = vector.broadcast %43 : vector<1x16xf32> to vector<8x16xf32>
    %45 = arith.addf %42, %44 : vector<8x16xf32>
    %c0_27 = arith.constant 0 : index
    %c0_28 = arith.constant 0 : index
    %46 = vector.load %arg13[%c0_27, %c0_28] : memref<8x16xf32, #tpu.memory_space<vmem>>, vector<8x16xf32>
    tpu.vector_store %arg13[%c0_27, %c0_28], %45 {strides = array<i32>} : memref<8x16xf32, #tpu.memory_space<vmem>>, vector<8x16xf32>,
    return
  }
  func.func @transform_0(%arg0: i32) -> (i32, i32) {
    %c0_i32 = arith.constant 0 : i32
    %c0_i32_0 = arith.constant 0 : i32
    return %arg0, %c0_i32 : i32, i32
  }
  func.func @transform_1(%arg0: i32) -> (i32, i32) {
    %c0_i32 = arith.constant 0 : i32
    %c0_i32_0 = arith.constant 0 : i32
    %c0_i32_1 = arith.constant 0 : i32
    return %c0_i32, %c0_i32_0 : i32, i32
  }
  func.func @transform_2(%arg0: i32) -> (i32, i32) {
    %c0_i32 = arith.constant 0 : i32
    %c0_i32_0 = arith.constant 0 : i32
    %c0_i32_1 = arith.constant 0 : i32
    return %c0_i32, %c0_i32_0 : i32, i32
  }
  func.func @transform_3(%arg0: i32) -> (i32, i32) {
    %c0_i32 = arith.constant 0 : i32
    %c0_i32_0 = arith.constant 0 : i32
    %c0_i32_1 = arith.constant 0 : i32
    return %c0_i32, %c0_i32_0 : i32, i32
  }
  func.func @transform_4(%arg0: i32) -> (i32, i32) {
    %c0_i32 = arith.constant 0 : i32
    %c0_i32_0 = arith.constant 0 : i32
    %c0_i32_1 = arith.constant 0 : i32
    return %c0_i32, %c0_i32_0 : i32, i32
  }
  func.func @transform_5(%arg0: i32) -> (i32, i32) {
    %c0_i32 = arith.constant 0 : i32
    %c0_i32_0 = arith.constant 0 : i32
    %c0_i32_1 = arith.constant 0 : i32
    return %c0_i32, %c0_i32_0 : i32, i32
  }
  func.func @transform_6(%arg0: i32) -> (i32, i32) {
    %c0_i32 = arith.constant 0 : i32
    %c0_i32_0 = arith.constant 0 : i32
    %c0_i32_1 = arith.constant 0 : i32
    return %c0_i32, %c0_i32_0 : i32, i32
  }
  func.func @transform_7(%arg0: i32) -> (i32, i32) {
    %c0_i32 = arith.constant 0 : i32
    %c0_i32_0 = arith.constant 0 : i32
    %c0_i32_1 = arith.constant 0 : i32
    return %c0_i32, %c0_i32_0 : i32, i32
  }
  func.func @transform_8(%arg0: i32) -> (i32, i32) {
    %c0_i32 = arith.constant 0 : i32
    %c0_i32_0 = arith.constant 0 : i32
    %c0_i32_1 = arith.constant 0 : i32
    return %c0_i32, %c0_i32_0 : i32, i32
  }
  func.func @transform_9(%arg0: i32) -> (i32, i32) {
    %c0_i32 = arith.constant 0 : i32
    %c0_i32_0 = arith.constant 0 : i32
    %c0_i32_1 = arith.constant 0 : i32
    return %c0_i32, %c0_i32_0 : i32, i32
  }
  func.func @transform_10(%arg0: i32) -> (i32, i32) {
    %c0_i32 = arith.constant 0 : i32
    %c0_i32_0 = arith.constant 0 : i32
    %c0_i32_1 = arith.constant 0 : i32
    return %c0_i32, %c0_i32_0 : i32, i32
  }
  func.func @transform_11(%arg0: i32) -> (i32, i32) {
    %c0_i32 = arith.constant 0 : i32
    %c0_i32_0 = arith.constant 0 : i32
    %c0_i32_1 = arith.constant 0 : i32
    return %c0_i32, %c0_i32_0 : i32, i32
  }
  func.func @transform_12(%arg0: i32) -> (i32, i32) {
    %c0_i32 = arith.constant 0 : i32
    %c0_i32_0 = arith.constant 0 : i32
    return %arg0, %c0_i32 : i32, i32
  }
}

</mosaic_0001>

<llo_original>
// kernel: _fused_forward.1
$region0: #{_fused_forward.1}
  #allocation0 [shape = 'u32[]', space=smem, size = 0x4, offset = 0x4, fixed_abs, tag = 'smem constant byte address 0x4 - core index']
  #allocation1 [shape = 'u32[144,128]{1,0:T(1,128)}', space=vmem, size = 0x12000, scoped, tag = 'internal scratch']
  %s0 = inlined_call_operand.vmem [shape: f32[16,12], index: 0, kind: input, shape index: {}]
  %s1 = inlined_call_operand.vmem [shape: f32[1,12], index: 1, kind: input, shape index: {}]
  %s2 = inlined_call_operand.vmem [shape: f32[1,12], index: 2, kind: input, shape index: {}]
  %s3 = inlined_call_operand.vmem [shape: bf16[12,128], index: 3, kind: input, shape index: {}]
  %s4 = inlined_call_operand.vmem [shape: f32[1,128], index: 4, kind: input, shape index: {}]
  %s5 = inlined_call_operand.vmem [shape: f32[1,128], index: 5, kind: input, shape index: {}]
  %s6 = inlined_call_operand.vmem [shape: bf16[128,128], index: 6, kind: input, shape index: {}]
  %s7 = inlined_call_operand.vmem [shape: f32[1,128], index: 7, kind: input, shape index: {}]
  %s8 = inlined_call_operand.vmem [shape: f32[1,128], index: 8, kind: input, shape index: {}]
  %s9 = inlined_call_operand.vmem [shape: bf16[128,16], index: 9, kind: input, shape index: {}]
  %s10 = inlined_call_operand.vmem [shape: f32[1,16], index: 10, kind: input, shape index: {}]
  %s11 = inlined_call_operand.vmem [shape: f32[1,16], index: 11, kind: input, shape index: {}]
  %s12 = inlined_call_operand.hbm [shape: f32[16,16], index: 12, kind: output, shape index: {}]
  %s13 = sld [smem:[#allocation0]]
  $region81: #{_fused_forward.1} parent=0
    _
  %s15 = ssub.s32 1, %s13
  %s16 = scalar_select 0, %s15, %s13
  $region1: #{_fused_forward.1} parent=0
    #allocation2 [shape = 'u8[8192]{0}', space=vmem, size = 0x2000, scoped, tag = 'output window, operand 0']
    #allocation3 [shape = 's32[2]{0}', space=sflag, size = 0x8, scoped, tag = 'scoped memory for _fused_forward.1']
    %17 = vsyncpa [#allocation3], 0
    %s18 = scalar_lea.sflag [#allocation3], 1
    %19 = vsyncpa %s18, 0
    loop: start=0, step=1, limit=4
    $region2: #{_fused_forward.1} parent=1 // loop_pre_header
      _
    $region3: #{_fused_forward.1} parent=1 // loop_header
      %s21 = sphi 0, %s25
      %p22 = scmp.ge.s32.totalorder %s21, 4
      %s31 = sphi 0, %s33
      %s34 = sphi 0, %s31
      %s35 = sphi 0, %s34
      %s51 = sphi 0, %s35
      %s55 = sphi 0, %s55
      %s57 = sphi 0, %s55
      %s58 = sphi 0, %s57
      %s72 = sphi 0, %s58
      %s76 = sphi 0, %s76
      %s78 = sphi 0, %s76
      %s79 = sphi 0, %s78
      %s93 = sphi 0, %s79
      %s97 = sphi 0, %s97
      %s99 = sphi 0, %s97
      %s100 = sphi 0, %s99
      %s114 = sphi 0, %s100
      %s118 = sphi 0, %s118
      %s120 = sphi 0, %s118
      %s121 = sphi 0, %s120
      %s135 = sphi 0, %s121
      %s139 = sphi 0, %s139
      %s141 = sphi 0, %s139
      %s142 = sphi 0, %s141
      %s156 = sphi 0, %s142
      %s160 = sphi 0, %s160
      %s162 = sphi 0, %s160
      %s163 = sphi 0, %s162
      %s177 = sphi 0, %s163
      %s181 = sphi 0, %s181
      %s183 = sphi 0, %s181
      %s184 = sphi 0, %s183
      %s198 = sphi 0, %s184
      %s202 = sphi 0, %s202
      %s204 = sphi 0, %s202
      %s205 = sphi 0, %s204
      %s219 = sphi 0, %s205
      %s223 = sphi 0, %s223
      %s225 = sphi 0, %s223
      %s226 = sphi 0, %s225
      %s240 = sphi 0, %s226
      %s244 = sphi 0, %s244
      %s246 = sphi 0, %s244
      %s247 = sphi 0, %s246
      %s261 = sphi 0, %s247
      %s265 = sphi 0, %s265
      %s267 = sphi 0, %s265
      %s268 = sphi 0, %s267
      %s282 = sphi 0, %s268
      %s288 = sphi 0, %s290
      %s291 = sphi 0, %s288
      %s292 = sphi 0, %s291
      %s308 = sphi 0, %s292
    $region4: #{_fused_forward.1} parent=1 // loop_header_branch
      %24 = sbr.rel (%p22) target = $region8
    $region5: #{_fused_forward.1} parent=1 // loop_body
      %s26 = ssub.s32 %s21, 1
      %s27 = ssub.s32 %s21, 2
      %s28 = sadd.s32 %s21, 1
      %s29 = ssub.s32 %s21, %s28
      %p30 = scmp.eq.s32.totalorder %s29, 0
      %s32 = sadd.s32 %s31, 1
      %s33 = scalar_select %p30, %s31, %s32
      %p36 = pneg %p30
      %p37 = scmp.eq.s32.totalorder %s21, 1
      %p38 = por %p36, %p37
      %p39 = scmp.ne.s32.totalorder %s31, %s34
      %p40 = scmp.eq.s32.totalorder %s21, 0
      %p41 = por %p39, %p40
      %p42 = scmp.ne.s32.totalorder %s31, %s34
      %p43 = scmp.eq.s32.totalorder %s26, 1
      %p44 = por %p42, %p43
      %p45 = scmp.ne.s32.totalorder %s34, %s35
      %p46 = scmp.eq.s32.totalorder %s26, 0
      %p47 = por %p45, %p46
      %p48 = scmp.ne.s32.totalorder %s34, %s35
      %p49 = scmp.eq.s32.totalorder %s27, 1
      %p50 = por %p48, %p49
      %p52 = scmp.ne.s32.totalorder %s35, %s51
      %p53 = scmp.eq.s32.totalorder %s27, 0
      %p54 = por %p52, %p53
      %s56 = sadd.s32 %s55, 1
      %p59 = scmp.eq.s32.totalorder %s21, 1
      %p60 = scmp.ne.s32.totalorder %s55, %s57
      %p61 = scmp.eq.s32.totalorder %s21, 0
      %p62 = por %p60, %p61
      %p63 = scmp.ne.s32.totalorder %s55, %s57
      %p64 = scmp.eq.s32.totalorder %s26, 1
      %p65 = por %p63, %p64
      %p66 = scmp.ne.s32.totalorder %s57, %s58
      %p67 = scmp.eq.s32.totalorder %s26, 0
      %p68 = por %p66, %p67
      %p69 = scmp.ne.s32.totalorder %s57, %s58
      %p70 = scmp.eq.s32.totalorder %s27, 1
      %p71 = por %p69, %p70
      %p73 = scmp.ne.s32.totalorder %s58, %s72
      %p74 = scmp.eq.s32.totalorder %s27, 0
      %p75 = por %p73, %p74
      %s77 = sadd.s32 %s76, 1
      %p80 = scmp.eq.s32.totalorder %s21, 1
      %p81 = scmp.ne.s32.totalorder %s76, %s78
      %p82 = scmp.eq.s32.totalorder %s21, 0
      %p83 = por %p81, %p82
      %p84 = scmp.ne.s32.totalorder %s76, %s78
      %p85 = scmp.eq.s32.totalorder %s26, 1
      %p86 = por %p84, %p85
      %p87 = scmp.ne.s32.totalorder %s78, %s79
      %p88 = scmp.eq.s32.totalorder %s26, 0
      %p89 = por %p87, %p88
      %p90 = scmp.ne.s32.totalorder %s78, %s79
      %p91 = scmp.eq.s32.totalorder %s27, 1
      %p92 = por %p90, %p91
      %p94 = scmp.ne.s32.totalorder %s79, %s93
      %p95 = scmp.eq.s32.totalorder %s27, 0
      %p96 = por %p94, %p95
      %s98 = sadd.s32 %s97, 1
      %p101 = scmp.eq.s32.totalorder %s21, 1
      %p102 = scmp.ne.s32.totalorder %s97, %s99
      %p103 = scmp.eq.s32.totalorder %s21, 0
      %p104 = por %p102, %p103
      %p105 = scmp.ne.s32.totalorder %s97, %s99
      %p106 = scmp.eq.s32.totalorder %s26, 1
      %p107 = por %p105, %p106
      %p108 = scmp.ne.s32.totalorder %s99, %s100
      %p109 = scmp.eq.s32.totalorder %s26, 0
      %p110 = por %p108, %p109
      %p111 = scmp.ne.s32.totalorder %s99, %s100
      %p112 = scmp.eq.s32.totalorder %s27, 1
      %p113 = por %p111, %p112
      %p115 = scmp.ne.s32.totalorder %s100, %s114
      %p116 = scmp.eq.s32.totalorder %s27, 0
      %p117 = por %p115, %p116
      %s119 = sadd.s32 %s118, 1
      %p122 = scmp.eq.s32.totalorder %s21, 1
      %p123 = scmp.ne.s32.totalorder %s118, %s120
      %p124 = scmp.eq.s32.totalorder %s21, 0
      %p125 = por %p123, %p124
      %p126 = scmp.ne.s32.totalorder %s118, %s120
      %p127 = scmp.eq.s32.totalorder %s26, 1
      %p128 = por %p126, %p127
      %p129 = scmp.ne.s32.totalorder %s120, %s121
      %p130 = scmp.eq.s32.totalorder %s26, 0
      %p131 = por %p129, %p130
      %p132 = scmp.ne.s32.totalorder %s120, %s121
      %p133 = scmp.eq.s32.totalorder %s27, 1
      %p134 = por %p132, %p133
      %p136 = scmp.ne.s32.totalorder %s121, %s135
      %p137 = scmp.eq.s32.totalorder %s27, 0
      %p138 = por %p136, %p137
      %s140 = sadd.s32 %s139, 1
      %p143 = scmp.eq.s32.totalorder %s21, 1
      %p144 = scmp.ne.s32.totalorder %s139, %s141
      %p145 = scmp.eq.s32.totalorder %s21, 0
      %p146 = por %p144, %p145
      %p147 = scmp.ne.s32.totalorder %s139, %s141
      %p148 = scmp.eq.s32.totalorder %s26, 1
      %p149 = por %p147, %p148
      %p150 = scmp.ne.s32.totalorder %s141, %s142
      %p151 = scmp.eq.s32.totalorder %s26, 0
      %p152 = por %p150, %p151
      %p153 = scmp.ne.s32.totalorder %s141, %s142
      %p154 = scmp.eq.s32.totalorder %s27, 1
      %p155 = por %p153, %p154
      %p157 = scmp.ne.s32.totalorder %s142, %s156
      %p158 = scmp.eq.s32.totalorder %s27, 0
      %p159 = por %p157, %p158
      %s161 = sadd.s32 %s160, 1
      %p164 = scmp.eq.s32.totalorder %s21, 1
      %p165 = scmp.ne.s32.totalorder %s160, %s162
      %p166 = scmp.eq.s32.totalorder %s21, 0
      %p167 = por %p165, %p166
      %p168 = scmp.ne.s32.totalorder %s160, %s162
      %p169 = scmp.eq.s32.totalorder %s26, 1
      %p170 = por %p168, %p169
      %p171 = scmp.ne.s32.totalorder %s162, %s163
      %p172 = scmp.eq.s32.totalorder %s26, 0
      %p173 = por %p171, %p172
      %p174 = scmp.ne.s32.totalorder %s162, %s163
      %p175 = scmp.eq.s32.totalorder %s27, 1
      %p176 = por %p174, %p175
      %p178 = scmp.ne.s32.totalorder %s163, %s177
      %p179 = scmp.eq.s32.totalorder %s27, 0
      %p180 = por %p178, %p179
      %s182 = sadd.s32 %s181, 1
      %p185 = scmp.eq.s32.totalorder %s21, 1
      %p186 = scmp.ne.s32.totalorder %s181, %s183
      %p187 = scmp.eq.s32.totalorder %s21, 0
      %p188 = por %p186, %p187
      %p189 = scmp.ne.s32.totalorder %s181, %s183
      %p190 = scmp.eq.s32.totalorder %s26, 1
      %p191 = por %p189, %p190
      %p192 = scmp.ne.s32.totalorder %s183, %s184
      %p193 = scmp.eq.s32.totalorder %s26, 0
      %p194 = por %p192, %p193
      %p195 = scmp.ne.s32.totalorder %s183, %s184
      %p196 = scmp.eq.s32.totalorder %s27, 1
      %p197 = por %p195, %p196
      %p199 = scmp.ne.s32.totalorder %s184, %s198
      %p200 = scmp.eq.s32.totalorder %s27, 0
      %p201 = por %p199, %p200
      %s203 = sadd.s32 %s202, 1
      %p206 = scmp.eq.s32.totalorder %s21, 1
      %p207 = scmp.ne.s32.totalorder %s202, %s204
      %p208 = scmp.eq.s32.totalorder %s21, 0
      %p209 = por %p207, %p208
      %p210 = scmp.ne.s32.totalorder %s202, %s204
      %p211 = scmp.eq.s32.totalorder %s26, 1
      %p212 = por %p210, %p211
      %p213 = scmp.ne.s32.totalorder %s204, %s205
      %p214 = scmp.eq.s32.totalorder %s26, 0
      %p215 = por %p213, %p214
      %p216 = scmp.ne.s32.totalorder %s204, %s205
      %p217 = scmp.eq.s32.totalorder %s27, 1
      %p218 = por %p216, %p217
      %p220 = scmp.ne.s32.totalorder %s205, %s219
      %p221 = scmp.eq.s32.totalorder %s27, 0
      %p222 = por %p220, %p221
      %s224 = sadd.s32 %s223, 1
      %p227 = scmp.eq.s32.totalorder %s21, 1
      %p228 = scmp.ne.s32.totalorder %s223, %s225
      %p229 = scmp.eq.s32.totalorder %s21, 0
      %p230 = por %p228, %p229
      %p231 = scmp.ne.s32.totalorder %s223, %s225
      %p232 = scmp.eq.s32.totalorder %s26, 1
      %p233 = por %p231, %p232
      %p234 = scmp.ne.s32.totalorder %s225, %s226
      %p235 = scmp.eq.s32.totalorder %s26, 0
      %p236 = por %p234, %p235
      %p237 = scmp.ne.s32.totalorder %s225, %s226
      %p238 = scmp.eq.s32.totalorder %s27, 1
      %p239 = por %p237, %p238
      %p241 = scmp.ne.s32.totalorder %s226, %s240
      %p242 = scmp.eq.s32.totalorder %s27, 0
      %p243 = por %p241, %p242
      %s245 = sadd.s32 %s244, 1
      %p248 = scmp.eq.s32.totalorder %s21, 1
      %p249 = scmp.ne.s32.totalorder %s244, %s246
      %p250 = scmp.eq.s32.totalorder %s21, 0
      %p251 = por %p249, %p250
      %p252 = scmp.ne.s32.totalorder %s244, %s246
      %p253 = scmp.eq.s32.totalorder %s26, 1
      %p254 = por %p252, %p253
      %p255 = scmp.ne.s32.totalorder %s246, %s247
      %p256 = scmp.eq.s32.totalorder %s26, 0
      %p257 = por %p255, %p256
      %p258 = scmp.ne.s32.totalorder %s246, %s247
      %p259 = scmp.eq.s32.totalorder %s27, 1
      %p260 = por %p258, %p259
      %p262 = scmp.ne.s32.totalorder %s247, %s261
      %p263 = scmp.eq.s32.totalorder %s27, 0
      %p264 = por %p262, %p263
      %s266 = sadd.s32 %s265, 1
      %p269 = scmp.eq.s32.totalorder %s21, 1
      %p270 = scmp.ne.s32.totalorder %s265, %s267
      %p271 = scmp.eq.s32.totalorder %s21, 0
      %p272 = por %p270, %p271
      %p273 = scmp.ne.s32.totalorder %s265, %s267
      %p274 = scmp.eq.s32.totalorder %s26, 1
      %p275 = por %p273, %p274
      %p276 = scmp.ne.s32.totalorder %s267, %s268
      %p277 = scmp.eq.s32.totalorder %s26, 0
      %p278 = por %p276, %p277
      %p279 = scmp.ne.s32.totalorder %s267, %s268
      %p280 = scmp.eq.s32.totalorder %s27, 1
      %p281 = por %p279, %p280
      %p283 = scmp.ne.s32.totalorder %s268, %s282
      %p284 = scmp.eq.s32.totalorder %s27, 0
      %p285 = por %p283, %p284
      %s286 = ssub.s32 %s21, %s28
      %p287 = scmp.eq.s32.totalorder %s286, 0
      %s289 = sadd.s32 %s288, 1
      %s290 = scalar_select %p287, %s288, %s289
      %p293 = pneg %p287
      %p294 = scmp.eq.s32.totalorder %s21, 1
      %p295 = por %p293, %p294
      %p296 = scmp.ne.s32.totalorder %s288, %s291
      %p297 = scmp.eq.s32.totalorder %s21, 0
      %p298 = por %p296, %p297
      %p299 = scmp.ne.s32.totalorder %s288, %s291
      %p300 = scmp.eq.s32.totalorder %s26, 1
      %p301 = por %p299, %p300
      %p302 = scmp.ne.s32.totalorder %s291, %s292
      %p303 = scmp.eq.s32.totalorder %s26, 0
      %p304 = por %p302, %p303
      %p305 = scmp.ne.s32.totalorder %s291, %s292
      %p306 = scmp.eq.s32.totalorder %s27, 1
      %p307 = por %p305, %p306
      %p309 = scmp.ne.s32.totalorder %s292, %s308
      %p310 = scmp.eq.s32.totalorder %s27, 0
      %p311 = por %p309, %p310
      %p312 = scmp.le.s32.totalorder 1, %s21
      %p313 = scmp.lt.s32.totalorder %s21, 3
      %p314 = pnand %p312, %p313
      %p315 = pneg %p314
      // Predicated region
      $region9: #{_fused_forward.1} parent=5 // pred_check
        _
      $region10: #{_fused_forward.1} parent=5 // pred_check_branch
        %317 = sbr.rel (%p314) target = $region12
      $region11: #{_fused_forward.1} parent=5 // pred_region
        %s318 = ssub.s32 %s21, 1
        // Predicated region
        $region13: #{_fused_forward.1} parent=11 // pred_check
          %p319 = pneg %p68
        $region14: #{_fused_forward.1} parent=11 // pred_check_branch
          %321 = sbr.rel (%p319) target = $region16
        $region15: #{_fused_forward.1} parent=11 // pred_region
          _
        $region16: #{_fused_forward.1} parent=11 // pred_fallthru
          _
        // Predicated region
        $region17: #{_fused_forward.1} parent=11 // pred_check
          %p322 = pneg %p89
        $region18: #{_fused_forward.1} parent=11 // pred_check_branch
          %324 = sbr.rel (%p322) target = $region20
        $region19: #{_fused_forward.1} parent=11 // pred_region
          _
        $region20: #{_fused_forward.1} parent=11 // pred_fallthru
          _
        // Predicated region
        $region21: #{_fused_forward.1} parent=11 // pred_check
          %p325 = pneg %p110
        $region22: #{_fused_forward.1} parent=11 // pred_check_branch
          %327 = sbr.rel (%p325) target = $region24
        $region23: #{_fused_forward.1} parent=11 // pred_region
          _
        $region24: #{_fused_forward.1} parent=11 // pred_fallthru
          _
        // Predicated region
        $region25: #{_fused_forward.1} parent=11 // pred_check
          %p328 = pneg %p131
        $region26: #{_fused_forward.1} parent=11 // pred_check_branch
          %330 = sbr.rel (%p328) target = $region28
        $region27: #{_fused_forward.1} parent=11 // pred_region
          _
        $region28: #{_fused_forward.1} parent=11 // pred_fallthru
          _
        // Predicated region
        $region29: #{_fused_forward.1} parent=11 // pred_check
          %p331 = pneg %p152
        $region30: #{_fused_forward.1} parent=11 // pred_check_branch
          %333 = sbr.rel (%p331) target = $region32
        $region31: #{_fused_forward.1} parent=11 // pred_region
          _
        $region32: #{_fused_forward.1} parent=11 // pred_fallthru
          _
        // Predicated region
        $region33: #{_fused_forward.1} parent=11 // pred_check
          %p334 = pneg %p173
        $region34: #{_fused_forward.1} parent=11 // pred_check_branch
          %336 = sbr.rel (%p334) target = $region36
        $region35: #{_fused_forward.1} parent=11 // pred_region
          _
        $region36: #{_fused_forward.1} parent=11 // pred_fallthru
          _
        // Predicated region
        $region37: #{_fused_forward.1} parent=11 // pred_check
          %p337 = pneg %p194
        $region38: #{_fused_forward.1} parent=11 // pred_check_branch
          %339 = sbr.rel (%p337) target = $region40
        $region39: #{_fused_forward.1} parent=11 // pred_region
          _
        $region40: #{_fused_forward.1} parent=11 // pred_fallthru
          _
        // Predicated region
        $region41: #{_fused_forward.1} parent=11 // pred_check
          %p340 = pneg %p215
        $region42: #{_fused_forward.1} parent=11 // pred_check_branch
          %342 = sbr.rel (%p340) target = $region44
        $region43: #{_fused_forward.1} parent=11 // pred_region
          _
        $region44: #{_fused_forward.1} parent=11 // pred_fallthru
          _
        // Predicated region
        $region45: #{_fused_forward.1} parent=11 // pred_check
          %p343 = pneg %p236
        $region46: #{_fused_forward.1} parent=11 // pred_check_branch
          %345 = sbr.rel (%p343) target = $region48
        $region47: #{_fused_forward.1} parent=11 // pred_region
          _
        $region48: #{_fused_forward.1} parent=11 // pred_fallthru
          _
        // Predicated region
        $region49: #{_fused_forward.1} parent=11 // pred_check
          %p346 = pneg %p257
        $region50: #{_fused_forward.1} parent=11 // pred_check_branch
          %348 = sbr.rel (%p346) target = $region52
        $region51: #{_fused_forward.1} parent=11 // pred_region
          _
        $region52: #{_fused_forward.1} parent=11 // pred_fallthru
          _
        // Predicated region
        $region53: #{_fused_forward.1} parent=11 // pred_check
          %p349 = pneg %p278
        $region54: #{_fused_forward.1} parent=11 // pred_check_branch
          %351 = sbr.rel (%p349) target = $region56
        $region55: #{_fused_forward.1} parent=11 // pred_region
          _
        $region56: #{_fused_forward.1} parent=11 // pred_fallthru
          _
      $region12: #{_fused_forward.1} parent=5 // pred_fallthru
        _
      %p352 = scmp.lt.s32.totalorder %s21, 2
      // Predicated region
      $region57: #{_fused_forward.1} parent=5 // pred_check
        %p353 = pneg %p352
      $region58: #{_fused_forward.1} parent=5 // pred_check_branch
        %355 = sbr.rel (%p353) target = $region60
      $region59: #{_fused_forward.1} parent=5 // pred_region
        // Predicated region
        $region61: #{_fused_forward.1} parent=59 // pred_check
          %p356 = pneg %p41
        $region62: #{_fused_forward.1} parent=59 // pred_check_branch
          %358 = sbr.rel (%p356) target = $region64
        $region63: #{_fused_forward.1} parent=59 // pred_region
          %p359 = scmp.lt.s32.totalorder %s21, 1
          %s360 = scalar_select %p359, %s21, 1
          %s361 = smul.addr %s360, 8
          %s362 = scalar_lea.vmem %s0, %s361
        $region64: #{_fused_forward.1} parent=59 // pred_fallthru
          _
      $region60: #{_fused_forward.1} parent=5 // pred_fallthru
        _
      %p363 = scmp.le.s32.totalorder 1, %s21
      %p364 = scmp.lt.s32.totalorder %s21, 3
      %p365 = pnand %p363, %p364
      %p366 = pneg %p365
      // Predicated region
      $region65: #{_fused_forward.1} parent=5 // pred_check
        _
      $region66: #{_fused_forward.1} parent=5 // pred_check_branch
        %368 = sbr.rel (%p365) target = $region68
      $region67: #{_fused_forward.1} parent=5 // pred_region
        %s369 = ssub.s32 %s21, 1
        %p370 = scmp.lt.s32.totalorder %s26, 1
        %s371 = scalar_select %p370, %s26, 1
        %s372 = smul.addr %s371, 8
        %s373 = scalar_lea.vmem %s0, %s372
        %p374 = pneg %p47
        %p375 = pneg %p44
        %p376 = pneg %p68
        %p377 = pneg %p65
        %p378 = pneg %p89
        %p379 = pneg %p86
        %p380 = pneg %p110
        %p381 = pneg %p107
        %p382 = pneg %p131
        %p383 = pneg %p128
        %p384 = pneg %p152
        %p385 = pneg %p149
        %p386 = pneg %p173
        %p387 = pneg %p170
        %p388 = pneg %p194
        %p389 = pneg %p191
        %p390 = pneg %p215
        %p391 = pneg %p212
        %p392 = pneg %p236
        %p393 = pneg %p233
        %p394 = pneg %p257
        %p395 = pneg %p254
        %p396 = pneg %p278
        %p397 = pneg %p275
        %p398 = pneg %p304
        %p399 = pneg %p301
        %s400 = sand.u32 %s291, 1
        %s401 = scalar_lea.sflag [#allocation3], %s400
        %s402 = sand.u32 %s291, 1
        %s403 = smul.addr %s402, 8
        %s404 = scalar_lea.vmem [#allocation2], %s403
        %p405 = scmp.lt.s32.totalorder %s26, 1
        %s406 = scalar_select %p405, %s26, 1
        %s407 = smul.addr %s406, 8
        %s408 = scalar_lea.vmem %s0, %s407
        %v410 = vld [vmem:[%s408] sm:$0xff]
        %v411 = vld [vmem:[%s1] sm:$0x1]
        %v413 = vlaneseq
        %v414 = vshrl.u32 %v413, 7
        %v415 = vsub.s32 0, %v414
        %v416 = vrot.slane %v411, %v415
        %v418 = vsub.f32 %v410, %v416
        %v419 = vld [vmem:[%s2] sm:$0x1]
        %v421 = vlaneseq
        %v422 = vshrl.u32 %v421, 7
        %v423 = vsub.s32 0, %v422
        %v424 = vrot.slane %v419, %v423
        %v426 = vmul.f32 %v418, %v424
        %v427 = vpack.c.bf16 %v426, %v426
        %v428 = vld [vmem:[%s3] sm:$0xf]
        %v429 = vld [vmem:[%s3 + $0x4] sm:$0x3]
        %v432 = vunpack.c.l.b16 %v428
        %v433 = vunpack.c.l.b16 %v429
        %v434 = vpack.c.b16 %v433, %v432
        %vm435 = vcmask 97280
        %v437 = vsel %vm435, %v427, 0
        %vm439 = vcmask 1045504
        %v441 = vsel %vm439, %v434, 0
        %443 = vmatprep.subr.bf16.mxu0 0
        %444 = vmatpush1.bf16.msra.mxu0 0
        %445 = vmatprep.subr.bf16.mxu0 0
        %446 = vmatpush1.bf16.msra.mxu0 0
        %447 = vmatprep.subr.bf16.mxu0 0
        %448 = vmatpush1.bf16.msra.mxu0 0
        %449 = vmatprep.subr.bf16.mxu0 0
        %450 = vmatpush1.bf16.msra.mxu0 0
        %451 = vmatprep.subr.bf16.mxu0 0
        %452 = vmatpush1.bf16.msra.mxu0 0
        %453 = vmatprep.subr.bf16.mxu0 0
        %454 = vmatpush1.bf16.msra.mxu0 0
        %455 = vmatprep.subr.bf16.mxu0 0
        %456 = vmatpush1.bf16.msra.mxu0 0
        %457 = vmatprep.subr.bf16.mxu0 0
        %458 = vmatpush1.bf16.msra.mxu0 %v441
        %459 = vmatprep.subr.bf16.mxu0 0
        %460 = vmatpush2.bf16.msra.mxu0 0
        %461 = vmatprep.subr.bf16.mxu0 0
        %462 = vmatpush2.bf16.msra.mxu0 0
        %463 = vmatprep.subr.bf16.mxu0 0
        %464 = vmatpush2.bf16.msra.mxu0 0
        %465 = vmatprep.subr.bf16.mxu0 0
        %466 = vmatpush2.bf16.msra.mxu0 0
        %467 = vmatprep.subr.bf16.mxu0 0
        %468 = vmatpush2.bf16.msra.mxu0 0
        %469 = vmatprep.subr.bf16.mxu0 0
        %470 = vmatpush2.bf16.msra.mxu0 0
        %471 = vmatprep.subr.bf16.mxu0 0
        %472 = vmatpush2.bf16.msra.mxu0 0
        %473 = vmatprep.subr.bf16.mxu0 0
        %474 = vmatpush2.bf16.msra.mxu0 0
        %475 = vmatprep.mubr.bf16.mxu0 0
        %476 = vmatmul.mubr.bf16.gmra.mxu0 %v437
        %v477 = vpop.f32.mrf.mxu0
        %v478 = vadd.f32 0.0, %v477
        %v479 = vpop.f32.mrf.mxu0
        %v480 = vpop.f32.mrf.mxu0
        %v481 = vpop.f32.mrf.mxu0
        %482 = vdwg.mxu0
        %v483 = vld [vmem:[%s4] sm:$0x1]
        %v485 = vlaneseq
        %v486 = vshrl.u32 %v485, 7
        %v487 = vsub.s32 0, %v486
        %v488 = vrot.slane %v483, %v487
        %v490 = vmul.f32 %v488, %v478
        %v491 = vld [vmem:[%s5] sm:$0x1]
        %v493 = vlaneseq
        %v494 = vshrl.u32 %v493, 7
        %v495 = vsub.s32 0, %v494
        %v496 = vrot.slane %v491, %v495
        %v498 = vadd.f32 %v490, %v496
        %v499 = vxor.u32 %v498, 2147483648
        %v500 = vmul.f32 %v499, 1.442695
        %v501 = vpow.pop %v500
        %v502 = vadd.f32 %v501, 1.0
        %v503 = vrcp.pop %v502
        %v504 = vmul.f32 1.0, %v503
        %v505 = vmul.f32 %v498, %v504
        %v506 = vpack.c.bf16 %v505, %v505
        %v507 = vld [vmem:[%s6] sm:$0xf]
        %v508 = vld [vmem:[%s6 + $0x4] sm:$0xf]
        %v509 = vld [vmem:[%s6 + $0x8] sm:$0xf]
        %v510 = vld [vmem:[%s6 + $0xc] sm:$0xf]
        %v511 = vld [vmem:[%s6 + $0x10] sm:$0xf]
        %v512 = vld [vmem:[%s6 + $0x14] sm:$0xf]
        %v513 = vld [vmem:[%s6 + $0x18] sm:$0xf]
        %v514 = vld [vmem:[%s6 + $0x1c] sm:$0xf]
        %v515 = vld [vmem:[%s6 + $0x20] sm:$0xf]
        %v516 = vld [vmem:[%s6 + $0x24] sm:$0xf]
        %v517 = vld [vmem:[%s6 + $0x28] sm:$0xf]
        %v518 = vld [vmem:[%s6 + $0x2c] sm:$0xf]
        %v519 = vld [vmem:[%s6 + $0x30] sm:$0xf]
        %v520 = vld [vmem:[%s6 + $0x34] sm:$0xf]
        %v521 = vld [vmem:[%s6 + $0x38] sm:$0xf]
        %v522 = vld [vmem:[%s6 + $0x3c] sm:$0xf]
        %v539 = vunpack.c.l.b16 %v507
        %v540 = vunpack.c.l.b16 %v508
        %v541 = vunpack.c.l.b16 %v509
        %v542 = vunpack.c.l.b16 %v510
        %v543 = vunpack.c.l.b16 %v511
        %v544 = vunpack.c.l.b16 %v512
        %v545 = vunpack.c.l.b16 %v513
        %v546 = vunpack.c.l.b16 %v514
        %v547 = vunpack.c.l.b16 %v515
        %v548 = vunpack.c.l.b16 %v516
        %v549 = vunpack.c.l.b16 %v517
        %v550 = vunpack.c.l.b16 %v518
        %v551 = vunpack.c.l.b16 %v519
        %v552 = vunpack.c.l.b16 %v520
        %v553 = vunpack.c.l.b16 %v521
        %v554 = vunpack.c.l.b16 %v522
        %v555 = vpack.c.b16 %v540, %v539
        %v556 = vpack.c.b16 %v542, %v541
        %v557 = vpack.c.b16 %v544, %v543
        %v558 = vpack.c.b16 %v546, %v545
        %v559 = vpack.c.b16 %v548, %v547
        %v560 = vpack.c.b16 %v550, %v549
        %v561 = vpack.c.b16 %v552, %v551
        %v562 = vpack.c.b16 %v554, %v553
        %571 = vmatprep.subr.bf16.mxu0 0
        %572 = vmatpush1.bf16.msra.mxu0 %v562
        %573 = vmatprep.subr.bf16.mxu0 0
        %574 = vmatpush1.bf16.msra.mxu0 %v561
        %575 = vmatprep.subr.bf16.mxu0 0
        %576 = vmatpush1.bf16.msra.mxu0 %v560
        %577 = vmatprep.subr.bf16.mxu0 0
        %578 = vmatpush1.bf16.msra.mxu0 %v559
        %579 = vmatprep.subr.bf16.mxu0 0
        %580 = vmatpush1.bf16.msra.mxu0 %v558
        %581 = vmatprep.subr.bf16.mxu0 0
        %582 = vmatpush1.bf16.msra.mxu0 %v557
        %583 = vmatprep.subr.bf16.mxu0 0
        %584 = vmatpush1.bf16.msra.mxu0 %v556
        %585 = vmatprep.subr.bf16.mxu0 0
        %586 = vmatpush1.bf16.msra.mxu0 %v555
        %587 = vmatprep.subr.bf16.mxu0 0
        %588 = vmatpush2.bf16.msra.mxu0 0
        %589 = vmatprep.subr.bf16.mxu0 0
        %590 = vmatpush2.bf16.msra.mxu0 0
        %591 = vmatprep.subr.bf16.mxu0 0
        %592 = vmatpush2.bf16.msra.mxu0 0
        %593 = vmatprep.subr.bf16.mxu0 0
        %594 = vmatpush2.bf16.msra.mxu0 0
        %595 = vmatprep.subr.bf16.mxu0 0
        %596 = vmatpush2.bf16.msra.mxu0 0
        %597 = vmatprep.subr.bf16.mxu0 0
        %598 = vmatpush2.bf16.msra.mxu0 0
        %599 = vmatprep.subr.bf16.mxu0 0
        %600 = vmatpush2.bf16.msra.mxu0 0
        %601 = vmatprep.subr.bf16.mxu0 0
        %602 = vmatpush2.bf16.msra.mxu0 0
        %603 = vmatprep.mubr.bf16.mxu0 0
        %604 = vmatmul.mubr.bf16.gmra.mxu0 %v506
        %v605 = vpop.f32.mrf.mxu0
        %v606 = vadd.f32 0.0, %v605
        %v607 = vpop.f32.mrf.mxu0
        %v608 = vpop.f32.mrf.mxu0
        %v609 = vpop.f32.mrf.mxu0
        %610 = vdwg.mxu0
        %v611 = vld [vmem:[%s7] sm:$0x1]
        %v613 = vlaneseq
        %v614 = vshrl.u32 %v613, 7
        %v615 = vsub.s32 0, %v614
        %v616 = vrot.slane %v611, %v615
        %v618 = vmul.f32 %v616, %v606
        %v619 = vld [vmem:[%s8] sm:$0x1]
        %v621 = vlaneseq
        %v622 = vshrl.u32 %v621, 7
        %v623 = vsub.s32 0, %v622
        %v624 = vrot.slane %v619, %v623
        %v626 = vadd.f32 %v618, %v624
        %v627 = vxor.u32 %v626, 2147483648
        %v628 = vmul.f32 %v627, 1.442695
        %v629 = vpow.pop %v628
        %v630 = vadd.f32 %v629, 1.0
        %v631 = vrcp.pop %v630
        %v632 = vmul.f32 1.0, %v631
        %v633 = vmul.f32 %v626, %v632
        %v634 = vpack.c.bf16 %v633, %v633
        %v635 = vld [vmem:[%s9] sm:$0xf]
        %v636 = vld [vmem:[%s9 + $0x4] sm:$0xf]
        %v637 = vld [vmem:[%s9 + $0x8] sm:$0xf]
        %v638 = vld [vmem:[%s9 + $0xc] sm:$0xf]
        %v639 = vld [vmem:[%s9 + $0x10] sm:$0xf]
        %v640 = vld [vmem:[%s9 + $0x14] sm:$0xf]
        %v641 = vld [vmem:[%s9 + $0x18] sm:$0xf]
        %v642 = vld [vmem:[%s9 + $0x1c] sm:$0xf]
        %v643 = vld [vmem:[%s9 + $0x20] sm:$0xf]
        %v644 = vld [vmem:[%s9 + $0x24] sm:$0xf]
        %v645 = vld [vmem:[%s9 + $0x28] sm:$0xf]
        %v646 = vld [vmem:[%s9 + $0x2c] sm:$0xf]
        %v647 = vld [vmem:[%s9 + $0x30] sm:$0xf]
        %v648 = vld [vmem:[%s9 + $0x34] sm:$0xf]
        %v649 = vld [vmem:[%s9 + $0x38] sm:$0xf]
        %v650 = vld [vmem:[%s9 + $0x3c] sm:$0xf]
        %v667 = vunpack.c.l.b16 %v635
        %v668 = vunpack.c.l.b16 %v636
        %v669 = vunpack.c.l.b16 %v637
        %v670 = vunpack.c.l.b16 %v638
        %v671 = vunpack.c.l.b16 %v639
        %v672 = vunpack.c.l.b16 %v640
        %v673 = vunpack.c.l.b16 %v641
        %v674 = vunpack.c.l.b16 %v642
        %v675 = vunpack.c.l.b16 %v643
        %v676 = vunpack.c.l.b16 %v644
        %v677 = vunpack.c.l.b16 %v645
        %v678 = vunpack.c.l.b16 %v646
        %v679 = vunpack.c.l.b16 %v647
        %v680 = vunpack.c.l.b16 %v648
        %v681 = vunpack.c.l.b16 %v649
        %v682 = vunpack.c.l.b16 %v650
        %v683 = vpack.c.b16 %v668, %v667
        %v684 = vpack.c.b16 %v670, %v669
        %v685 = vpack.c.b16 %v672, %v671
        %v686 = vpack.c.b16 %v674, %v673
        %v687 = vpack.c.b16 %v676, %v675
        %v688 = vpack.c.b16 %v678, %v677
        %v689 = vpack.c.b16 %v680, %v679
        %v690 = vpack.c.b16 %v682, %v681
        %699 = vmatprep.subr.bf16.mxu0 0
        %700 = vmatpush1.bf16.msra.mxu0 %v690
        %701 = vmatprep.subr.bf16.mxu0 0
        %702 = vmatpush1.bf16.msra.mxu0 %v689
        %703 = vmatprep.subr.bf16.mxu0 0
        %704 = vmatpush1.bf16.msra.mxu0 %v688
        %705 = vmatprep.subr.bf16.mxu0 0
        %706 = vmatpush1.bf16.msra.mxu0 %v687
        %707 = vmatprep.subr.bf16.mxu0 0
        %708 = vmatpush1.bf16.msra.mxu0 %v686
        %709 = vmatprep.subr.bf16.mxu0 0
        %710 = vmatpush1.bf16.msra.mxu0 %v685
        %711 = vmatprep.subr.bf16.mxu0 0
        %712 = vmatpush1.bf16.msra.mxu0 %v684
        %713 = vmatprep.subr.bf16.mxu0 0
        %714 = vmatpush1.bf16.msra.mxu0 %v683
        %715 = vmatprep.subr.bf16.mxu0 0
        %716 = vmatpush2.bf16.msra.mxu0 0
        %717 = vmatprep.subr.bf16.mxu0 0
        %718 = vmatpush2.bf16.msra.mxu0 0
        %719 = vmatprep.subr.bf16.mxu0 0
        %720 = vmatpush2.bf16.msra.mxu0 0
        %721 = vmatprep.subr.bf16.mxu0 0
        %722 = vmatpush2.bf16.msra.mxu0 0
        %723 = vmatprep.subr.bf16.mxu0 0
        %724 = vmatpush2.bf16.msra.mxu0 0
        %725 = vmatprep.subr.bf16.mxu0 0
        %726 = vmatpush2.bf16.msra.mxu0 0
        %727 = vmatprep.subr.bf16.mxu0 0
        %728 = vmatpush2.bf16.msra.mxu0 0
        %729 = vmatprep.subr.bf16.mxu0 0
        %730 = vmatpush2.bf16.msra.mxu0 0
        %731 = vmatprep.mubr.bf16.mxu0 0
        %732 = vmatmul.mubr.bf16.gmra.mxu0 %v634
        %v733 = vpop.f32.mrf.mxu0
        %v734 = vadd.f32 0.0, %v733
        %v735 = vpop.f32.mrf.mxu0
        %v736 = vpop.f32.mrf.mxu0
        %v737 = vpop.f32.mrf.mxu0
        %738 = vdwg.mxu0
        %v739 = vld [vmem:[%s10] sm:$0x1]
        %v741 = vlaneseq
        %v742 = vshrl.u32 %v741, 7
        %v743 = vsub.s32 0, %v742
        %v744 = vrot.slane %v739, %v743
        %v746 = vmul.f32 %v744, %v734
        %v747 = vld [vmem:[%s11] sm:$0x1]
        %v749 = vlaneseq
        %v750 = vshrl.u32 %v749, 7
        %v751 = vsub.s32 0, %v750
        %v752 = vrot.slane %v747, %v751
        %v754 = vadd.f32 %v746, %v752
        %vm755 = vcmask 130048
        %756 = vst.msk [vmem:[%s404] sm:$0xff] %vm755, %v754
        %s757 = sand.u32 %s291, 1
        %s758 = scalar_lea.sflag [#allocation3], %s757
        %s759 = sand.u32 %s291, 1
        %s760 = smul.addr %s759, 8
        %s761 = scalar_lea.vmem [#allocation2], %s760
        // Predicated region
        $region69: #{_fused_forward.1} parent=67 // pred_check
          %p762 = pneg %p301
        $region70: #{_fused_forward.1} parent=67 // pred_check_branch
          %764 = sbr.rel (%p762) target = $region72
        $region71: #{_fused_forward.1} parent=67 // pred_region
          %s766 = ssub.s32 128, 128
          %767 = vsyncadd %s758, %s766
          %s768 = smul.addr %s26, 128
          %s769 = scalar_lea.hbm %s12, %s768
          %s771 = sshll.u32 %s761, 4
          %s772 = int_to_ptr.vmem [resolvable:$true] %s771
          %774 = dma.vmem_to_hbm [thread:$0]  %s772, 128, %s769, %s758
        $region72: #{_fused_forward.1} parent=67 // pred_fallthru
          _
      $region68: #{_fused_forward.1} parent=5 // pred_fallthru
        _
      %p775 = scmp.le.s32.totalorder 2, %s21
      // Predicated region
      $region73: #{_fused_forward.1} parent=5 // pred_check
        %p776 = pneg %p775
      $region74: #{_fused_forward.1} parent=5 // pred_check_branch
        %778 = sbr.rel (%p776) target = $region76
      $region75: #{_fused_forward.1} parent=5 // pred_region
        %s779 = ssub.s32 %s21, 2
        // Predicated region
        $region77: #{_fused_forward.1} parent=75 // pred_check
          %p780 = pneg %p307
        $region78: #{_fused_forward.1} parent=75 // pred_check_branch
          %782 = sbr.rel (%p780) target = $region80
        $region79: #{_fused_forward.1} parent=75 // pred_region
          %s783 = sand.u32 %s292, 1
          %s784 = scalar_lea.sflag [#allocation3], %s783
          %s785 = sand.u32 %s292, 1
          %s786 = smul.addr %s785, 8
          %s787 = scalar_lea.vmem [#allocation2], %s786
          %788 = dma.done %s784, 128
        $region80: #{_fused_forward.1} parent=75 // pred_fallthru
          _
      $region76: #{_fused_forward.1} parent=5 // pred_fallthru
        _
    $region6: #{_fused_forward.1} parent=1 // loop_footer
      %s25 = sadd.s32 1, %s21
    $region7: #{_fused_forward.1} parent=1 // loop_footer_branch
      %20 = sbr.rel target = $region3
    $region8: #{_fused_forward.1} parent=1 // loop_exit
      _
    %789 = vsyncpa [#allocation3], 1
    %s790 = scalar_lea.sflag [#allocation3], 1
    %791 = vsyncpa %s790, 1

</llo_original>
